<compile_context>
chip_gen: v5e
topology: v5e:2x2
jax: 0.10.0
libtpu: 0.0.40
codegen_flags: <defaults>
</compile_context>

<pallas_src>
import functools

import jax
import jax.numpy as jnp
from jax import lax
from jax.experimental import pallas as pl
from jax.experimental.pallas import tpu as pltpu


# ----------------------------------------------------------------------------
# Kernel 1: fused backbone (one im2col matmul + bias + ReLU + per-image GAP)
# ----------------------------------------------------------------------------
def _backbone_kernel(x_ref, w_ref, b_ref, o_ref, *, hw, images_per_step, inv_hw):
    # x_ref: (images_per_step*HW, 9*Cin) bf16   im2col patches for this step's images
    # w_ref: (9*Cin, F)                  bf16   pre-transposed conv weight (no in-kernel .T)
    # b_ref: (1, F)                      f32
    # o_ref: (1, images_per_step, F)     f32    pooled features, lane-dense slab store
    y = jnp.dot(x_ref[...], w_ref[...], preferred_element_type=jnp.float32)  # ONE MXU push
    y = jnp.maximum(y + b_ref[...], 0.0)                                     # bias+ReLU, f32
    # per-image global-average-pool: static sublane-aligned slices (HW % 8 == 0) + reduce
    pooled = jnp.concatenate(
        [jnp.sum(y[i * hw:(i + 1) * hw, :], axis=0, keepdims=True) * inv_hw
         for i in range(images_per_step)],
        axis=0)                                                              # (ips, F)
    o_ref[0] = pooled.astype(o_ref.dtype)


def _im2col_3x3_same(x_nhwc):
    B, H, W, C = x_nhwc.shape
    xp = jnp.pad(x_nhwc, ((0, 0), (1, 1), (1, 1), (0, 0)))
    cols = []
    for dh in range(3):
        for dw in range(3):
            cols.append(xp[:, dh:dh + H, dw:dw + W, :])
    p = jnp.stack(cols, axis=3)                 # (B, H, W, 9, C): tap-major, channel-minor
    return p.reshape(B, H * W, 9 * C)


def backbone_forward(x_nchw, conv_w_kf, conv_b):
    """Stand-in conv backbone: 3x3 same conv + ReLU + GAP, one fused Pallas call.

    x_nchw: (B, Cin, H, W) f32;  conv_w_kf: (9*Cin, F) bf16;  conv_b: (1, F) f32.
    Returns (B, F) f32.
    """
    x = jnp.transpose(x_nchw, (0, 2, 3, 1))                      # NCHW -> NHWC
    B, H, W, Cin = x.shape
    HW, K = H * W, 9 * Cin
    F_ = conv_w_kf.shape[1]
    # bf16 MXU operands (halves DMA bytes); f32 accumulate.  B and HW are both row-side
    # dims, so the (B, HW, K) -> (B*HW, K) merge is layout-free and done outside.
    patches = _im2col_3x3_same(x).astype(jnp.bfloat16).reshape(B * HW, K)

    # Grid collapsed per perf review: 2 parallel steps keep both v7x TCs busy, 1 step if
    # B is odd.  On single-TC chips the extra step costs only ~0.35 µs.
    G = 2 if (B % 2 == 0 and B >= 2) else 1
    ips = B // G                                                  # images per grid step

    kernel = functools.partial(_backbone_kernel, hw=HW, images_per_step=ips, inv_hw=1.0 / HW)
    flops = 2 * B * HW * K * F_ + 2 * B * HW * F_
    bytes_acc = int(patches.size) * 2 + int(conv_w_kf.size) * 2 + int(conv_b.size) * 4 + B * F_ * 4
    out = pl.pallas_call(
        kernel,
        out_shape=jax.ShapeDtypeStruct((G, ips, F_), jnp.float32),
        grid=(G,),
        in_specs=[
            pl.BlockSpec((ips * HW, K), lambda g: (g, 0)),        # this step's patch rows
            pl.BlockSpec((K, F_), lambda g: (0, 0)),              # weight resident (const idx)
            pl.BlockSpec((1, F_), lambda g: (0, 0)),              # bias resident (const idx)
        ],
        # lane-dense (ips, F) slab per step; last two block dims == full array dims
        out_specs=pl.BlockSpec((1, ips, F_), lambda g: (g, 0, 0)),
        # distinct output block per step -> safe to shard across both v7x TensorCores
        compiler_params=pltpu.CompilerParams(dimension_semantics=("parallel",)),
        cost_estimate=pl.CostEstimate(flops=flops, transcendentals=0, bytes_accessed=bytes_acc),
    )(patches, conv_w_kf, conv_b)
    return out.reshape(B, F_)                                     # leading-dim merge: free


# ----------------------------------------------------------------------------
# Kernel 2: fused hypernetwork MLP + task head (BatchLinear, no bias), grid-less
# ----------------------------------------------------------------------------
def _hyper_head_kernel(feats_ref, flat_ref, *refs, num_hidden_layers, num_classes, feat_dim):
    # feats_ref: (C + B, F) f32      prototype features first, then support features
    # flat_ref : (1, C*F)   f32      flatten(prototype features), reshaped in the wrapper
    # refs     : (w0, b0, w1, b1, ..., w_out, b_out, o_ref)
    o_ref = refs[-1]
    wb = refs[:-1]
    feats = feats_ref[...]                                        # (C + B, F)

    # ---- hypernetwork MLP: single M=1 matmul chain ----
    h = jnp.dot(flat_ref[...], wb[0][...], preferred_element_type=jnp.float32) + wb[1][...]
    h = jnp.maximum(h, 0.0)
    for l in range(1, num_hidden_layers):                         # hidden layers (+ReLU)
        h = jnp.maximum(
            jnp.dot(h, wb[2 * l][...], preferred_element_type=jnp.float32)
            + wb[2 * l + 1][...], 0.0)
    w_flat = (jnp.dot(h, wb[-2][...], preferred_element_type=jnp.float32)
              + wb[-1][...])                                      # (1, C*F) classifier weight

    # Rebuild W as (C, F) with static lane slices + one sublane concat (avoids a
    # lane->sublane jnp.reshape, which is the only relayout-risky op at this size).
    w_rows = [w_flat[:, c * feat_dim:(c + 1) * feat_dim] for c in range(num_classes)]
    w_cf = jnp.concatenate(w_rows, axis=0) if num_classes > 1 else w_rows[0]   # (C, F)

    # ---- task head: BatchLinear(F, C, bias=False) == feats @ W.T, ONE MXU contraction ----
    out = lax.dot_general(feats, w_cf,
                          dimension_numbers=(((1,), (1,)), ((), ())),
                          preferred_element_type=jnp.float32)     # (C + B, C)
    o_ref[...] = out.astype(o_ref.dtype)


def hyper_head_forward(feats, hnet_layers, *, num_classes, feat_dim):
    """Whole hypernet chain + head in ONE grid-less Pallas call."""
    n_total = feats.shape[0]
    # flatten(prototype features) done in plain JAX: avoids any in-kernel reshape.
    feats_flat = feats[:num_classes].reshape(1, num_classes * feat_dim)
    flat = []
    for w, b in hnet_layers:
        flat.extend((w, b))
    kernel = functools.partial(
        _hyper_head_kernel,
        num_hidden_layers=len(hnet_layers) - 1,
        num_classes=num_classes,
        feat_dim=feat_dim)
    flops = sum(2 * int(w.shape[0]) * int(w.shape[1]) for w, _ in hnet_layers)
    flops += 2 * n_total * feat_dim * num_classes
    bytes_acc = (int(feats.size) + int(feats_flat.size)) * 4
    bytes_acc += sum((int(w.size) + int(b.size)) * 4 for w, b in hnet_layers)
    bytes_acc += n_total * num_classes * 4
    # No grid / no BlockSpecs: full (tiny) arrays land in VMEM, no pointless grid prologue.
    return pl.pallas_call(
        kernel,
        out_shape=jax.ShapeDtypeStruct((n_total, num_classes), jnp.float32),
        cost_estimate=pl.CostEstimate(flops=flops, transcendentals=0, bytes_accessed=bytes_acc),
    )(feats, feats_flat, *flat)


# ----------------------------------------------------------------------------
# Forward pass (glue in plain JAX, hot paths are the two fused kernels above)
# ----------------------------------------------------------------------------
def hyper_cmtl_forward(params, support_set_nchw, task_idx, cfg):
    C = cfg['num_classes_per_task']
    Pc = cfg['prototypes_channels']
    P = cfg['prototypes_size']
    F_ = cfg['num_features']

    # z = emb(task_idx) -> 2D prototypes, one image per class
    z = params['emb'][task_idx]
    z_2d = z.reshape(C, Pc, P, P)
    if Pc == 1:
        z_2d = jnp.repeat(z_2d, 3, axis=1)            # .repeat(1, 3, 1, 1)
    prototype = z_2d                                  # (torch source: `prototype = a` == z_2d)

    # backbone(prototypes) and backbone(support_set): fused into ONE Pallas call
    # when the image shapes match (prototype rows come first).
    if prototype.shape[1:] == support_set_nchw.shape[1:]:
        feats = backbone_forward(
            jnp.concatenate([prototype, support_set_nchw], axis=0),
            params['conv_w'], params['conv_b'])
    else:
        feats = jnp.concatenate([
            backbone_forward(prototype, params['conv_w'], params['conv_b']),
            backbone_forward(support_set_nchw, params['conv_w'], params['conv_b']),
        ], axis=0)

    # hypernet(prot_backbone_out.flatten()) -> classifier.weight; BatchLinear head
    # applied to BOTH prototype and support features inside one fused Pallas call.
    out_all = hyper_head_forward(feats, params['hypernet'],
                                 num_classes=C, feat_dim=F_)
    prot_task_head_out = out_all[:C]                  # task_head(prot_backbone_out).squeeze(0)
    task_head_out = out_all[C:]                       # task_head(backbone_out).squeeze(0)
    return task_head_out, prot_task_head_out


# ----------------------------------------------------------------------------
# Deterministic parameter construction
# ----------------------------------------------------------------------------
def init_model(key, *, num_tasks=1, num_classes_per_task=2, prototypes_channels=1,
               prototypes_size=16, num_features=32, hyper_hidden_features=32,
               hyper_hidden_layers=2, mean_init_prototypes=0.0,
               std_init_prototypes=1.0):
    keys = iter(jax.random.split(key, 64))
    C = num_classes_per_task
    F_ = num_features
    in_channels = 3                       # backbone (resnet-style) takes 3-channel input
    size_prot = prototypes_size * prototypes_size * prototypes_channels * C
    size_in_hyper = F_ * prototypes_channels * C

    def lin(in_f, out_f, scale=0.05):
        # stored PRE-TRANSPOSED: (in, out) so the kernel computes x @ W (no .T)
        w = scale * jax.random.normal(next(keys), (in_f, out_f), jnp.float32)
        b = scale * jax.random.normal(next(keys), (1, out_f), jnp.float32)
        return w, b

    # nn.Embedding(num_tasks, size_prot) with normal(mean, std) init
    emb = (mean_init_prototypes
           + std_init_prototypes
           * jax.random.normal(next(keys), (num_tasks, size_prot), jnp.float32))

    # Stand-in conv backbone (see TODO at top): PyTorch layout (F, Cin, 3, 3) is
    # flattened + transposed ONCE here to (9*Cin, F) matching the im2col tap order
    # (dh, dw, cin), and cast to bf16 (MXU operand dtype).
    conv_w_pt = 0.1 * jax.random.normal(next(keys), (F_, in_channels, 3, 3), jnp.float32)
    conv_w = jnp.transpose(conv_w_pt, (2, 3, 1, 0)).reshape(9 * in_channels, F_)
    conv_w = conv_w.astype(jnp.bfloat16)
    conv_b = 0.05 * jax.random.normal(next(keys), (1, F_), jnp.float32)

    # HyperNetwork_seq for the single hypo-parameter: classifier.weight (C, F), no bias
    hypernet = [lin(size_in_hyper, hyper_hidden_features)]
    for _ in range(hyper_hidden_layers - 1):
        hypernet.append(lin(hyper_hidden_features, hyper_hidden_features))
    hypernet.append(lin(hyper_hidden_features, C * F_, scale=0.02))

    return dict(emb=emb, conv_w=conv_w, conv_b=conv_b, hypernet=hypernet)


if __name__ == "__main__":
    cfg = dict(num_tasks=1, num_classes_per_task=2, prototypes_channels=1,
               prototypes_size=16, num_features=32,
               hyper_hidden_features=32, hyper_hidden_layers=2)
    key = jax.random.PRNGKey(0)
    k_param, k_data = jax.random.split(key)
    params = init_model(k_param, **cfg)

    # support_set in PyTorch NCHW convention, 3 channels (resnet-style input)
    support_set = jax.random.normal(k_data, (2, 3, 16, 16), jnp.float32)

    forward = jax.jit(lambda p, s, t: hyper_cmtl_forward(p, s, t, cfg))
    task_head_out, prot_task_head_out = forward(params, support_set, 0)
    task_head_out, prot_task_head_out = jax.block_until_ready(
        (task_head_out, prot_task_head_out))

    C = cfg['num_classes_per_task']
    assert task_head_out.shape == (support_set.shape[0], C)
    assert prot_task_head_out.shape == (C, C)
    assert task_head_out.dtype == jnp.float32
    assert bool(jnp.all(jnp.isfinite(task_head_out)))
    assert bool(jnp.all(jnp.isfinite(prot_task_head_out)))
    print("KERNEL_OK")
</pallas_src>

<mosaic_0001>
module attributes {stable_mosaic.version = 11 : i64} {
  func.func @_backbone_kernel(%arg0: i32, %arg1: memref<512x27xbf16, #tpu.memory_space<vmem>>, %arg2: memref<27x32xbf16, #tpu.memory_space<vmem>>, %arg3: memref<1x32xf32, #tpu.memory_space<vmem>>, %arg4: memref<1x2x32xf32, #tpu.memory_space<vmem>>) attributes {dimension_semantics = [#tpu.dimension_semantics<parallel>], iteration_bounds = array<i64: 2>, scalar_prefetch = 0 : i64, scratch_operands = 0 : i64, tpu.core_type = #tpu.core_type<tc>, window_params = [{transform_indices = @transform_0, window_bounds = array<i64: 512, 27>}, {pipeline_mode = #tpu.pipeline_mode<synchronous>, transform_indices = @transform_1, window_bounds = array<i64: 27, 32>}, {pipeline_mode = #tpu.pipeline_mode<synchronous>, transform_indices = @transform_2, window_bounds = array<i64: 1, 32>}, {transform_indices = @transform_3, window_bounds = array<i64: 1, 2, 32>}]} {
    %c0 = arith.constant 0 : index
    %c0_0 = arith.constant 0 : index
    %0 = vector.load %arg1[%c0, %c0_0] : memref<512x27xbf16, #tpu.memory_space<vmem>>, vector<512x27xbf16>
    %c0_1 = arith.constant 0 : index
    %c0_2 = arith.constant 0 : index
    %1 = vector.load %arg2[%c0_1, %c0_2] : memref<27x32xbf16, #tpu.memory_space<vmem>>, vector<27x32xbf16>
    %cst = arith.constant dense<0.000000e+00> : vector<512x32xf32>
    %2 = tpu.matmul %0, %1, %cst {dimension_numbers = #tpu.dot_dimension_numbers<[1], [0], [0], [1], [0, 0, 1, 1], [], []>} : vector<512x27xbf16>, vector<27x32xbf16>, vector<512x32xf32> -> vector<512x32xf32>
    %c0_3 = arith.constant 0 : index
    %c0_4 = arith.constant 0 : index
    %3 = vector.load %arg3[%c0_3, %c0_4] : memref<1x32xf32, #tpu.memory_space<vmem>>, vector<1x32xf32>
    %4 = vector.broadcast %3 : vector<1x32xf32> to vector<512x32xf32>
    %5 = arith.addf %2, %4 : vector<512x32xf32>
    %cst_5 = arith.constant 0.000000e+00 : f32
    %6 = vector.broadcast %cst_5 : f32 to vector<512x32xf32>
    %7 = arith.maximumf %5, %6 : vector<512x32xf32>
    %8 = vector.extract_strided_slice %7 {offsets = [0, 0], sizes = [256, 32], strides = [1, 1]} : vector<512x32xf32> to vector<256x32xf32>
    %cst_6 = arith.constant dense<0.000000e+00> : vector<32xf32>
    %9 = vector.multi_reduction <add>, %8, %cst_6 [0] : vector<256x32xf32> to vector<32xf32>
    %10 = vector.shape_cast %9 : vector<32xf32> to vector<1x32xf32>
    %cst_7 = arith.constant 3.906250e-03 : f32
    %11 = vector.broadcast %cst_7 : f32 to vector<1x32xf32>
    %12 = arith.mulf %10, %11 : vector<1x32xf32>
    %13 = vector.extract_strided_slice %7 {offsets = [256, 0], sizes = [256, 32], strides = [1, 1]} : vector<512x32xf32> to vector<256x32xf32>
    %cst_8 = arith.constant dense<0.000000e+00> : vector<32xf32>
    %14 = vector.multi_reduction <add>, %13, %cst_8 [0] : vector<256x32xf32> to vector<32xf32>
    %15 = vector.shape_cast %14 : vector<32xf32> to vector<1x32xf32>
    %cst_9 = arith.constant 3.906250e-03 : f32
    %16 = vector.broadcast %cst_9 : f32 to vector<1x32xf32>
    %17 = arith.mulf %15, %16 : vector<1x32xf32>
    %18 = tpu.concatenate %12, %17 in 0 : vector<1x32xf32>, vector<1x32xf32> -> vector<2x32xf32>
    %c0_10 = arith.constant 0 : index
    %c0_11 = arith.constant 0 : index
    %c0_12 = arith.constant 0 : index
    %19 = vector.load %arg4[%c0_10, %c0_11, %c0_12] : memref<1x2x32xf32, #tpu.memory_space<vmem>>, vector<1x2x32xf32>
    %20 = vector.shape_cast %19 : vector<1x2x32xf32> to vector<2x32xf32>
    %21 = vector.shape_cast %18 : vector<2x32xf32> to vector<1x2x32xf32>
    tpu.vector_store %arg4[%c0_10, %c0_11, %c0_12], %21 {strides = array<i32>} : memref<1x2x32xf32, #tpu.memory_space<vmem>>, vector<1x2x32xf32>,
    return
  }
  func.func @transform_0(%arg0: i32) -> (i32, i32) {
    %c0_i32 = arith.constant 0 : i32
    %c0_i32_0 = arith.constant 0 : i32
    return %arg0, %c0_i32 : i32, i32
  }
  func.func @transform_1(%arg0: i32) -> (i32, i32) {
    %c0_i32 = arith.constant 0 : i32
    %c0_i32_0 = arith.constant 0 : i32
    %c0_i32_1 = arith.constant 0 : i32
    return %c0_i32, %c0_i32_0 : i32, i32
  }
  func.func @transform_2(%arg0: i32) -> (i32, i32) {
    %c0_i32 = arith.constant 0 : i32
    %c0_i32_0 = arith.constant 0 : i32
    %c0_i32_1 = arith.constant 0 : i32
    return %c0_i32, %c0_i32_0 : i32, i32
  }
  func.func @transform_3(%arg0: i32) -> (i32, i32, i32) {
    %c0_i32 = arith.constant 0 : i32
    %c0_i32_0 = arith.constant 0 : i32
    %c0_i32_1 = arith.constant 0 : i32
    return %arg0, %c0_i32, %c0_i32_0 : i32, i32, i32
  }
}

module attributes {stable_mosaic.version = 11 : i64} {
  func.func @_hyper_head_kernel(%arg0: memref<4x32xf32, #tpu.memory_space<vmem>>, %arg1: memref<1x64xf32, #tpu.memory_space<vmem>>, %arg2: memref<64x32xf32, #tpu.memory_space<vmem>>, %arg3: memref<1x32xf32, #tpu.memory_space<vmem>>, %arg4: memref<32x32xf32, #tpu.memory_space<vmem>>, %arg5: memref<1x32xf32, #tpu.memory_space<vmem>>, %arg6: memref<32x64xf32, #tpu.memory_space<vmem>>, %arg7: memref<1x64xf32, #tpu.memory_space<vmem>>, %arg8: memref<4x2xf32, #tpu.memory_space<vmem>>) attributes {dimension_semantics = [], scalar_prefetch = 0 : i64, scratch_operands = 0 : i64, tpu.core_type = #tpu.core_type<tc>} {
    %c0 = arith.constant 0 : index
    %c0_0 = arith.constant 0 : index
    %0 = vector.load %arg0[%c0, %c0_0] : memref<4x32xf32, #tpu.memory_space<vmem>>, vector<4x32xf32>
    %c0_1 = arith.constant 0 : index
    %c0_2 = arith.constant 0 : index
    %1 = vector.load %arg1[%c0_1, %c0_2] : memref<1x64xf32, #tpu.memory_space<vmem>>, vector<1x64xf32>
    %c0_3 = arith.constant 0 : index
    %c0_4 = arith.constant 0 : index
    %2 = vector.load %arg2[%c0_3, %c0_4] : memref<64x32xf32, #tpu.memory_space<vmem>>, vector<64x32xf32>
    %cst = arith.constant dense<0.000000e+00> : vector<1x32xf32>
    %3 = tpu.matmul %1, %2, %cst {dimension_numbers = #tpu.dot_dimension_numbers<[1], [0], [0], [1], [0, 0, 1, 1], [], []>} : vector<1x64xf32>, vector<64x32xf32>, vector<1x32xf32> -> vector<1x32xf32>
    %c0_5 = arith.constant 0 : index
    %c0_6 = arith.constant 0 : index
    %4 = vector.load %arg3[%c0_5, %c0_6] : memref<1x32xf32, #tpu.memory_space<vmem>>, vector<1x32xf32>
    %5 = arith.addf %3, %4 : vector<1x32xf32>
    %cst_7 = arith.constant 0.000000e+00 : f32
    %6 = vector.broadcast %cst_7 : f32 to vector<1x32xf32>
    %7 = arith.maximumf %5, %6 : vector<1x32xf32>
    %c0_8 = arith.constant 0 : index
    %c0_9 = arith.constant 0 : index
    %8 = vector.load %arg4[%c0_8, %c0_9] : memref<32x32xf32, #tpu.memory_space<vmem>>, vector<32x32xf32>
    %cst_10 = arith.constant dense<0.000000e+00> : vector<1x32xf32>
    %9 = tpu.matmul %7, %8, %cst_10 {dimension_numbers = #tpu.dot_dimension_numbers<[1], [0], [0], [1], [0, 0, 1, 1], [], []>} : vector<1x32xf32>, vector<32x32xf32>, vector<1x32xf32> -> vector<1x32xf32>
    %c0_11 = arith.constant 0 : index
    %c0_12 = arith.constant 0 : index
    %10 = vector.load %arg5[%c0_11, %c0_12] : memref<1x32xf32, #tpu.memory_space<vmem>>, vector<1x32xf32>
    %11 = arith.addf %9, %10 : vector<1x32xf32>
    %cst_13 = arith.constant 0.000000e+00 : f32
    %12 = vector.broadcast %cst_13 : f32 to vector<1x32xf32>
    %13 = arith.maximumf %11, %12 : vector<1x32xf32>
    %c0_14 = arith.constant 0 : index
    %c0_15 = arith.constant 0 : index
    %14 = vector.load %arg6[%c0_14, %c0_15] : memref<32x64xf32, #tpu.memory_space<vmem>>, vector<32x64xf32>
    %cst_16 = arith.constant dense<0.000000e+00> : vector<1x64xf32>
    %15 = tpu.matmul %13, %14, %cst_16 {dimension_numbers = #tpu.dot_dimension_numbers<[1], [0], [0], [1], [0, 0, 1, 1], [], []>} : vector<1x32xf32>, vector<32x64xf32>, vector<1x64xf32> -> vector<1x64xf32>
    %c0_17 = arith.constant 0 : index
    %c0_18 = arith.constant 0 : index
    %16 = vector.load %arg7[%c0_17, %c0_18] : memref<1x64xf32, #tpu.memory_space<vmem>>, vector<1x64xf32>
    %17 = arith.addf %15, %16 : vector<1x64xf32>
    %18 = vector.extract_strided_slice %17 {offsets = [0, 0], sizes = [1, 32], strides = [1, 1]} : vector<1x64xf32> to vector<1x32xf32>
    %19 = vector.extract_strided_slice %17 {offsets = [0, 32], sizes = [1, 32], strides = [1, 1]} : vector<1x64xf32> to vector<1x32xf32>
    %20 = tpu.concatenate %18, %19 in 0 : vector<1x32xf32>, vector<1x32xf32> -> vector<2x32xf32>
    %cst_19 = arith.constant dense<0.000000e+00> : vector<4x2xf32>
    %21 = tpu.matmul %0, %20, %cst_19 {dimension_numbers = #tpu.dot_dimension_numbers<[1], [1], [0], [0], [0, 0, 1, 0], [], []>} : vector<4x32xf32>, vector<2x32xf32>, vector<4x2xf32> -> vector<4x2xf32>
    %c0_20 = arith.constant 0 : index
    %c0_21 = arith.constant 0 : index
    %22 = vector.load %arg8[%c0_20, %c0_21] : memref<4x2xf32, #tpu.memory_space<vmem>>, vector<4x2xf32>
    tpu.vector_store %arg8[%c0_20, %c0_21], %21 {strides = array<i32>} : memref<4x2xf32, #tpu.memory_space<vmem>>, vector<4x2xf32>,
    return
  }
}

</mosaic_0001>

<llo_original>
// kernel: _lambda_.2
$region0: #{_lambda_.2}
  #allocation0 [shape = 'u32[]', space=smem, size = 0x4, offset = 0x4, fixed_abs, tag = 'smem constant byte address 0x4 - core index']
  #allocation1 [shape = 'u32[72,128]{1,0:T(1,128)}', space=vmem, size = 0x9000, scoped, tag = 'internal scratch']
  %s0 = inlined_call_operand.vmem [shape: bf16[1024,27], index: 0, kind: input, shape index: {}]
  %s1 = inlined_call_operand.vmem [shape: bf16[27,32], index: 1, kind: input, shape index: {}]
  %s2 = inlined_call_operand.vmem [shape: f32[1,32], index: 2, kind: input, shape index: {}]
  %s3 = inlined_call_operand.vmem [shape: f32[2,2,32], index: 3, kind: output, shape index: {}]
  %s4 = sld [smem:[#allocation0]]
  $region45: #{_lambda_.2} parent=0
    _
  %s6 = ssub.s32 1, %s4
  %s7 = scalar_select 0, %s6, %s4
  loop: start=0, step=1, limit=4
  $region2: #{_lambda_.2} parent=0 // loop_pre_header
    _
  $region3: #{_lambda_.2} parent=0 // loop_header
    %s9 = sphi 0, %s13
    %p10 = scmp.ge.s32.totalorder %s9, 4
    %s19 = sphi 0, %s21
    %s22 = sphi 0, %s19
    %s23 = sphi 0, %s22
    %s39 = sphi 0, %s23
    %s43 = sphi 0, %s43
    %s45 = sphi 0, %s43
    %s46 = sphi 0, %s45
    %s60 = sphi 0, %s46
    %s64 = sphi 0, %s64
    %s66 = sphi 0, %s64
    %s67 = sphi 0, %s66
    %s81 = sphi 0, %s67
    %s87 = sphi 0, %s89
    %s90 = sphi 0, %s87
    %s91 = sphi 0, %s90
    %s107 = sphi 0, %s91
  $region4: #{_lambda_.2} parent=0 // loop_header_branch
    %12 = sbr.rel (%p10) target = $region8
  $region5: #{_lambda_.2} parent=0 // loop_body
    %s14 = ssub.s32 %s9, 1
    %s15 = ssub.s32 %s9, 2
    %s16 = sadd.s32 %s9, 1
    %s17 = ssub.s32 %s9, %s16
    %p18 = scmp.eq.s32.totalorder %s17, 0
    %s20 = sadd.s32 %s19, 1
    %s21 = scalar_select %p18, %s19, %s20
    %p24 = pneg %p18
    %p25 = scmp.eq.s32.totalorder %s9, 1
    %p26 = por %p24, %p25
    %p27 = scmp.ne.s32.totalorder %s19, %s22
    %p28 = scmp.eq.s32.totalorder %s9, 0
    %p29 = por %p27, %p28
    %p30 = scmp.ne.s32.totalorder %s19, %s22
    %p31 = scmp.eq.s32.totalorder %s14, 1
    %p32 = por %p30, %p31
    %p33 = scmp.ne.s32.totalorder %s22, %s23
    %p34 = scmp.eq.s32.totalorder %s14, 0
    %p35 = por %p33, %p34
    %p36 = scmp.ne.s32.totalorder %s22, %s23
    %p37 = scmp.eq.s32.totalorder %s15, 1
    %p38 = por %p36, %p37
    %p40 = scmp.ne.s32.totalorder %s23, %s39
    %p41 = scmp.eq.s32.totalorder %s15, 0
    %p42 = por %p40, %p41
    %s44 = sadd.s32 %s43, 1
    %p47 = scmp.eq.s32.totalorder %s9, 1
    %p48 = scmp.ne.s32.totalorder %s43, %s45
    %p49 = scmp.eq.s32.totalorder %s9, 0
    %p50 = por %p48, %p49
    %p51 = scmp.ne.s32.totalorder %s43, %s45
    %p52 = scmp.eq.s32.totalorder %s14, 1
    %p53 = por %p51, %p52
    %p54 = scmp.ne.s32.totalorder %s45, %s46
    %p55 = scmp.eq.s32.totalorder %s14, 0
    %p56 = por %p54, %p55
    %p57 = scmp.ne.s32.totalorder %s45, %s46
    %p58 = scmp.eq.s32.totalorder %s15, 1
    %p59 = por %p57, %p58
    %p61 = scmp.ne.s32.totalorder %s46, %s60
    %p62 = scmp.eq.s32.totalorder %s15, 0
    %p63 = por %p61, %p62
    %s65 = sadd.s32 %s64, 1
    %p68 = scmp.eq.s32.totalorder %s9, 1
    %p69 = scmp.ne.s32.totalorder %s64, %s66
    %p70 = scmp.eq.s32.totalorder %s9, 0
    %p71 = por %p69, %p70
    %p72 = scmp.ne.s32.totalorder %s64, %s66
    %p73 = scmp.eq.s32.totalorder %s14, 1
    %p74 = por %p72, %p73
    %p75 = scmp.ne.s32.totalorder %s66, %s67
    %p76 = scmp.eq.s32.totalorder %s14, 0
    %p77 = por %p75, %p76
    %p78 = scmp.ne.s32.totalorder %s66, %s67
    %p79 = scmp.eq.s32.totalorder %s15, 1
    %p80 = por %p78, %p79
    %p82 = scmp.ne.s32.totalorder %s67, %s81
    %p83 = scmp.eq.s32.totalorder %s15, 0
    %p84 = por %p82, %p83
    %s85 = ssub.s32 %s9, %s16
    %p86 = scmp.eq.s32.totalorder %s85, 0
    %s88 = sadd.s32 %s87, 1
    %s89 = scalar_select %p86, %s87, %s88
    %p92 = pneg %p86
    %p93 = scmp.eq.s32.totalorder %s9, 1
    %p94 = por %p92, %p93
    %p95 = scmp.ne.s32.totalorder %s87, %s90
    %p96 = scmp.eq.s32.totalorder %s9, 0
    %p97 = por %p95, %p96
    %p98 = scmp.ne.s32.totalorder %s87, %s90
    %p99 = scmp.eq.s32.totalorder %s14, 1
    %p100 = por %p98, %p99
    %p101 = scmp.ne.s32.totalorder %s90, %s91
    %p102 = scmp.eq.s32.totalorder %s14, 0
    %p103 = por %p101, %p102
    %p104 = scmp.ne.s32.totalorder %s90, %s91
    %p105 = scmp.eq.s32.totalorder %s15, 1
    %p106 = por %p104, %p105
    %p108 = scmp.ne.s32.totalorder %s91, %s107
    %p109 = scmp.eq.s32.totalorder %s15, 0
    %p110 = por %p108, %p109
    %p111 = scmp.le.s32.totalorder 1, %s9
    %p112 = scmp.lt.s32.totalorder %s9, 3
    %p113 = pnand %p111, %p112
    %p114 = pneg %p113
    // Predicated region
    $region9: #{_lambda_.2} parent=5 // pred_check
      _
    $region10: #{_lambda_.2} parent=5 // pred_check_branch
      %116 = sbr.rel (%p113) target = $region12
    $region11: #{_lambda_.2} parent=5 // pred_region
      %s117 = ssub.s32 %s9, 1
      // Predicated region
      $region13: #{_lambda_.2} parent=11 // pred_check
        %p118 = pneg %p56
      $region14: #{_lambda_.2} parent=11 // pred_check_branch
        %120 = sbr.rel (%p118) target = $region16
      $region15: #{_lambda_.2} parent=11 // pred_region
        _
      $region16: #{_lambda_.2} parent=11 // pred_fallthru
        _
      // Predicated region
      $region17: #{_lambda_.2} parent=11 // pred_check
        %p121 = pneg %p77
      $region18: #{_lambda_.2} parent=11 // pred_check_branch
        %123 = sbr.rel (%p121) target = $region20
      $region19: #{_lambda_.2} parent=11 // pred_region
        _
      $region20: #{_lambda_.2} parent=11 // pred_fallthru
        _
    $region12: #{_lambda_.2} parent=5 // pred_fallthru
      _
    %p124 = scmp.lt.s32.totalorder %s9, 2
    // Predicated region
    $region21: #{_lambda_.2} parent=5 // pred_check
      %p125 = pneg %p124
    $region22: #{_lambda_.2} parent=5 // pred_check_branch
      %127 = sbr.rel (%p125) target = $region24
    $region23: #{_lambda_.2} parent=5 // pred_region
      // Predicated region
      $region25: #{_lambda_.2} parent=23 // pred_check
        %p128 = pneg %p29
      $region26: #{_lambda_.2} parent=23 // pred_check_branch
        %130 = sbr.rel (%p128) target = $region28
      $region27: #{_lambda_.2} parent=23 // pred_region
        %s131 = smul.u32 64, %s9
        %p132 = scmp.lt.s32.totalorder %s131, 127
        %s133 = scalar_select %p132, %s131, 127
        %s134 = smul.addr %s133, 4
        %s135 = scalar_lea.vmem %s0, %s134
        %s136 = smul.u32 64, %s9
      $region28: #{_lambda_.2} parent=23 // pred_fallthru
        _
    $region24: #{_lambda_.2} parent=5 // pred_fallthru
      _
    %p137 = scmp.le.s32.totalorder 1, %s9
    %p138 = scmp.lt.s32.totalorder %s9, 3
    %p139 = pnand %p137, %p138
    %p140 = pneg %p139
    // Predicated region
    $region29: #{_lambda_.2} parent=5 // pred_check
      _
    $region30: #{_lambda_.2} parent=5 // pred_check_branch
      %142 = sbr.rel (%p139) target = $region32
    $region31: #{_lambda_.2} parent=5 // pred_region
      %s143 = ssub.s32 %s9, 1
      %s144 = smul.u32 64, %s14
      %p145 = scmp.lt.s32.totalorder %s144, 127
      %s146 = scalar_select %p145, %s144, 127
      %s147 = smul.addr %s146, 4
      %s148 = scalar_lea.vmem %s0, %s147
      %p149 = pneg %p35
      %p150 = pneg %p32
      %p151 = pneg %p56
      %p152 = pneg %p53
      %p153 = pneg %p77
      %p154 = pneg %p74
      %p155 = pneg %p103
      %p156 = pneg %p100
      %p157 = scmp.lt.s32.totalorder %s14, 1
      %s158 = scalar_select %p157, %s14, 1
      %s159 = smul.addr %s158, 2
      %s160 = scalar_lea.vmem %s3, %s159
      %s161 = smul.u32 64, %s14
      %p162 = scmp.lt.s32.totalorder %s161, 127
      %s163 = scalar_select %p162, %s161, 127
      %s164 = smul.addr %s163, 4
      %s165 = scalar_lea.vmem %s0, %s164
      %s166 = smul.u32 64, %s14
      %p167 = scmp.lt.s32.totalorder %s14, 1
      %s168 = scalar_select %p167, %s14, 1
      %s169 = smul.addr %s168, 2
      %s170 = scalar_lea.vmem %s3, %s169
      %v172 = vld [vmem:[%s165] sm:$0xf]
      %v173 = vld [vmem:[%s165 + $0x4] sm:$0xf]
      %v174 = vld [vmem:[%s165 + $0x8] sm:$0xf]
      %v175 = vld [vmem:[%s165 + $0xc] sm:$0xf]
      %v176 = vld [vmem:[%s165 + $0x10] sm:$0xf]
      %v177 = vld [vmem:[%s165 + $0x14] sm:$0xf]
      %v178 = vld [vmem:[%s165 + $0x18] sm:$0xf]
      %v179 = vld [vmem:[%s165 + $0x1c] sm:$0xf]
      %v180 = vld [vmem:[%s165 + $0x20] sm:$0xf]
      %v181 = vld [vmem:[%s165 + $0x24] sm:$0xf]
      %v182 = vld [vmem:[%s165 + $0x28] sm:$0xf]
      %v183 = vld [vmem:[%s165 + $0x2c] sm:$0xf]
      %v184 = vld [vmem:[%s165 + $0x30] sm:$0xf]
      %v185 = vld [vmem:[%s165 + $0x34] sm:$0xf]
      %v186 = vld [vmem:[%s165 + $0x38] sm:$0xf]
      %v187 = vld [vmem:[%s165 + $0x3c] sm:$0xf]
      %v188 = vld [vmem:[%s165 + $0x40] sm:$0xf]
      %v189 = vld [vmem:[%s165 + $0x44] sm:$0xf]
      %v190 = vld [vmem:[%s165 + $0x48] sm:$0xf]
      %v191 = vld [vmem:[%s165 + $0x4c] sm:$0xf]
      %v192 = vld [vmem:[%s165 + $0x50] sm:$0xf]
      %v193 = vld [vmem:[%s165 + $0x54] sm:$0xf]
      %v194 = vld [vmem:[%s165 + $0x58] sm:$0xf]
      %v195 = vld [vmem:[%s165 + $0x5c] sm:$0xf]
      %v196 = vld [vmem:[%s165 + $0x60] sm:$0xf]
      %v197 = vld [vmem:[%s165 + $0x64] sm:$0xf]
      %v198 = vld [vmem:[%s165 + $0x68] sm:$0xf]
      %v199 = vld [vmem:[%s165 + $0x6c] sm:$0xf]
      %v200 = vld [vmem:[%s165 + $0x70] sm:$0xf]
      %v201 = vld [vmem:[%s165 + $0x74] sm:$0xf]
      %v202 = vld [vmem:[%s165 + $0x78] sm:$0xf]
      %v203 = vld [vmem:[%s165 + $0x7c] sm:$0xf]
      %v204 = vld [vmem:[%s165 + $0x80] sm:$0xf]
      %v205 = vld [vmem:[%s165 + $0x84] sm:$0xf]
      %v206 = vld [vmem:[%s165 + $0x88] sm:$0xf]
      %v207 = vld [vmem:[%s165 + $0x8c] sm:$0xf]
      %v208 = vld [vmem:[%s165 + $0x90] sm:$0xf]
      %v209 = vld [vmem:[%s165 + $0x94] sm:$0xf]
      %v210 = vld [vmem:[%s165 + $0x98] sm:$0xf]
      %v211 = vld [vmem:[%s165 + $0x9c] sm:$0xf]
      %v212 = vld [vmem:[%s165 + $0xa0] sm:$0xf]
      %v213 = vld [vmem:[%s165 + $0xa4] sm:$0xf]
      %v214 = vld [vmem:[%s165 + $0xa8] sm:$0xf]
      %v215 = vld [vmem:[%s165 + $0xac] sm:$0xf]
      %v216 = vld [vmem:[%s165 + $0xb0] sm:$0xf]
      %v217 = vld [vmem:[%s165 + $0xb4] sm:$0xf]
      %v218 = vld [vmem:[%s165 + $0xb8] sm:$0xf]
      %v219 = vld [vmem:[%s165 + $0xbc] sm:$0xf]
      %v220 = vld [vmem:[%s165 + $0xc0] sm:$0xf]
      %v221 = vld [vmem:[%s165 + $0xc4] sm:$0xf]
      %v222 = vld [vmem:[%s165 + $0xc8] sm:$0xf]
      %v223 = vld [vmem:[%s165 + $0xcc] sm:$0xf]
      %v224 = vld [vmem:[%s165 + $0xd0] sm:$0xf]
      %v225 = vld [vmem:[%s165 + $0xd4] sm:$0xf]
      %v226 = vld [vmem:[%s165 + $0xd8] sm:$0xf]
      %v227 = vld [vmem:[%s165 + $0xdc] sm:$0xf]
      %v228 = vld [vmem:[%s165 + $0xe0] sm:$0xf]
      %v229 = vld [vmem:[%s165 + $0xe4] sm:$0xf]
      %v230 = vld [vmem:[%s165 + $0xe8] sm:$0xf]
      %v231 = vld [vmem:[%s165 + $0xec] sm:$0xf]
      %v232 = vld [vmem:[%s165 + $0xf0] sm:$0xf]
      %v233 = vld [vmem:[%s165 + $0xf4] sm:$0xf]
      %v234 = vld [vmem:[%s165 + $0xf8] sm:$0xf]
      %v235 = vld [vmem:[%s165 + $0xfc] sm:$0xf]
      %v236 = vld [vmem:[%s1] sm:$0xf]
      %v237 = vld [vmem:[%s1 + $0x4] sm:$0xf]
      %v238 = vld [vmem:[%s1 + $0x8] sm:$0xf]
      %v239 = vld [vmem:[%s1 + $0xc] sm:$0x3]
      %v240 = vld [vmem:[%s2] sm:$0x1]
      %v242 = vperm.slane %v240, 0
      %v308 = vunpack.c.l.b16 %v172
      %v309 = vunpack.c.l.b16 %v173
      %v310 = vunpack.c.l.b16 %v174
      %v311 = vunpack.c.l.b16 %v175
      %v312 = vunpack.c.l.b16 %v176
      %v313 = vunpack.c.l.b16 %v177
      %v314 = vunpack.c.l.b16 %v178
      %v315 = vunpack.c.l.b16 %v179
      %v316 = vunpack.c.l.b16 %v180
      %v317 = vunpack.c.l.b16 %v181
      %v318 = vunpack.c.l.b16 %v182
      %v319 = vunpack.c.l.b16 %v183
      %v320 = vunpack.c.l.b16 %v184
      %v321 = vunpack.c.l.b16 %v185
      %v322 = vunpack.c.l.b16 %v186
      %v323 = vunpack.c.l.b16 %v187
      %v324 = vunpack.c.l.b16 %v188
      %v325 = vunpack.c.l.b16 %v189
      %v326 = vunpack.c.l.b16 %v190
      %v327 = vunpack.c.l.b16 %v191
      %v328 = vunpack.c.l.b16 %v192
      %v329 = vunpack.c.l.b16 %v193
      %v330 = vunpack.c.l.b16 %v194
      %v331 = vunpack.c.l.b16 %v195
      %v332 = vunpack.c.l.b16 %v196
      %v333 = vunpack.c.l.b16 %v197
      %v334 = vunpack.c.l.b16 %v198
      %v335 = vunpack.c.l.b16 %v199
      %v336 = vunpack.c.l.b16 %v200
      %v337 = vunpack.c.l.b16 %v201
      %v338 = vunpack.c.l.b16 %v202
      %v339 = vunpack.c.l.b16 %v203
      %v340 = vunpack.c.l.b16 %v204
      %v341 = vunpack.c.l.b16 %v205
      %v342 = vunpack.c.l.b16 %v206
      %v343 = vunpack.c.l.b16 %v207
      %v344 = vunpack.c.l.b16 %v208
      %v345 = vunpack.c.l.b16 %v209
      %v346 = vunpack.c.l.b16 %v210
      %v347 = vunpack.c.l.b16 %v211
      %v348 = vunpack.c.l.b16 %v212
      %v349 = vunpack.c.l.b16 %v213
      %v350 = vunpack.c.l.b16 %v214
      %v351 = vunpack.c.l.b16 %v215
      %v352 = vunpack.c.l.b16 %v216
      %v353 = vunpack.c.l.b16 %v217
      %v354 = vunpack.c.l.b16 %v218
      %v355 = vunpack.c.l.b16 %v219
      %v356 = vunpack.c.l.b16 %v220
      %v357 = vunpack.c.l.b16 %v221
      %v358 = vunpack.c.l.b16 %v222
      %v359 = vunpack.c.l.b16 %v223
      %v360 = vunpack.c.l.b16 %v224
      %v361 = vunpack.c.l.b16 %v225
      %v362 = vunpack.c.l.b16 %v226
      %v363 = vunpack.c.l.b16 %v227
      %v364 = vunpack.c.l.b16 %v228
      %v365 = vunpack.c.l.b16 %v229
      %v366 = vunpack.c.l.b16 %v230
      %v367 = vunpack.c.l.b16 %v231
      %v368 = vunpack.c.l.b16 %v232
      %v369 = vunpack.c.l.b16 %v233
      %v370 = vunpack.c.l.b16 %v234
      %v371 = vunpack.c.l.b16 %v235
      %v372 = vpack.c.b16 %v309, %v308
      %v373 = vpack.c.b16 %v311, %v310
      %v374 = vpack.c.b16 %v313, %v312
      %v375 = vpack.c.b16 %v315, %v314
      %v376 = vpack.c.b16 %v317, %v316
      %v377 = vpack.c.b16 %v319, %v318
      %v378 = vpack.c.b16 %v321, %v320
      %v379 = vpack.c.b16 %v323, %v322
      %v380 = vpack.c.b16 %v325, %v324
      %v381 = vpack.c.b16 %v327, %v326
      %v382 = vpack.c.b16 %v329, %v328
      %v383 = vpack.c.b16 %v331, %v330
      %v384 = vpack.c.b16 %v333, %v332
      %v385 = vpack.c.b16 %v335, %v334
      %v386 = vpack.c.b16 %v337, %v336
      %v387 = vpack.c.b16 %v339, %v338
      %v388 = vpack.c.b16 %v341, %v340
      %v389 = vpack.c.b16 %v343, %v342
      %v390 = vpack.c.b16 %v345, %v344
      %v391 = vpack.c.b16 %v347, %v346
      %v392 = vpack.c.b16 %v349, %v348
      %v393 = vpack.c.b16 %v351, %v350
      %v394 = vpack.c.b16 %v353, %v352
      %v395 = vpack.c.b16 %v355, %v354
      %v396 = vpack.c.b16 %v357, %v356
      %v397 = vpack.c.b16 %v359, %v358
      %v398 = vpack.c.b16 %v361, %v360
      %v399 = vpack.c.b16 %v363, %v362
      %v400 = vpack.c.b16 %v365, %v364
      %v401 = vpack.c.b16 %v367, %v366
      %v402 = vpack.c.b16 %v369, %v368
      %v403 = vpack.c.b16 %v371, %v370
      %v408 = vunpack.c.l.b16 %v236
      %v409 = vunpack.c.l.b16 %v237
      %v410 = vunpack.c.l.b16 %v238
      %v411 = vunpack.c.l.b16 %v239
      %v412 = vpack.c.b16 %v409, %v408
      %v413 = vpack.c.b16 %v411, %v410
      %vm415 = vcmask 220160
      %v417 = vsel %vm415, %v372, 0
      %v420 = vsel %vm415, %v373, 0
      %v423 = vsel %vm415, %v374, 0
      %v426 = vsel %vm415, %v375, 0
      %v429 = vsel %vm415, %v376, 0
      %v432 = vsel %vm415, %v377, 0
      %v435 = vsel %vm415, %v378, 0
      %v438 = vsel %vm415, %v379, 0
      %v441 = vsel %vm415, %v380, 0
      %v444 = vsel %vm415, %v381, 0
      %v447 = vsel %vm415, %v382, 0
      %v450 = vsel %vm415, %v383, 0
      %v453 = vsel %vm415, %v384, 0
      %v456 = vsel %vm415, %v385, 0
      %v459 = vsel %vm415, %v386, 0
      %v462 = vsel %vm415, %v387, 0
      %v465 = vsel %vm415, %v388, 0
      %v468 = vsel %vm415, %v389, 0
      %v471 = vsel %vm415, %v390, 0
      %v474 = vsel %vm415, %v391, 0
      %v477 = vsel %vm415, %v392, 0
      %v480 = vsel %vm415, %v393, 0
      %v483 = vsel %vm415, %v394, 0
      %v486 = vsel %vm415, %v395, 0
      %v489 = vsel %vm415, %v396, 0
      %v492 = vsel %vm415, %v397, 0
      %v495 = vsel %vm415, %v398, 0
      %v498 = vsel %vm415, %v399, 0
      %v501 = vsel %vm415, %v400, 0
      %v504 = vsel %vm415, %v401, 0
      %v507 = vsel %vm415, %v402, 0
      %v510 = vsel %vm415, %v403, 0
      %vm512 = vcmask 1044480
      %vm513 = vcmask 1045504
      %v514 = vsel %vm512, 4294967295, 65535
      %v515 = vsel %vm513, %v514, 0
      %v517 = vand.u32 %v413, %v515
      %519 = vmatpush.bf16.msra.mxu0 0
      %520 = vmatpush.bf16.msra.mxu0 0
      %521 = vmatpush.bf16.msra.mxu0 0
      %522 = vmatpush.bf16.msra.mxu0 0
      %523 = vmatpush.bf16.msra.mxu0 0
      %524 = vmatpush.bf16.msra.mxu0 0
      %525 = vmatpush.bf16.msra.mxu0 %v517
      %526 = vmatpush.bf16.msra.mxu0 %v412
      %527 = vmatmul.bf16.gmra.mxu0 %v417
      %v528 = vpop.f32.mrf.mxu0
      %v529 = vadd.f32 %v242, %v528
      %v530 = vpop.f32.mrf.mxu0
      %v531 = vadd.f32 %v242, %v530
      %532 = vmatmul.bf16.gmra.mxu0 %v420
      %v533 = vpop.f32.mrf.mxu0
      %v534 = vadd.f32 %v242, %v533
      %v535 = vpop.f32.mrf.mxu0
      %v536 = vadd.f32 %v242, %v535
      %537 = vmatmul.bf16.gmra.mxu0 %v423
      %v538 = vpop.f32.mrf.mxu0
      %v539 = vadd.f32 %v242, %v538
      %v540 = vpop.f32.mrf.mxu0
      %v541 = vadd.f32 %v242, %v540
      %542 = vmatmul.bf16.gmra.mxu0 %v426
      %v543 = vpop.f32.mrf.mxu0
      %v544 = vadd.f32 %v242, %v543
      %v545 = vpop.f32.mrf.mxu0
      %v546 = vadd.f32 %v242, %v545
      %547 = vmatmul.bf16.gmra.mxu0 %v429
      %v548 = vpop.f32.mrf.mxu0
      %v549 = vadd.f32 %v242, %v548
      %v550 = vpop.f32.mrf.mxu0
      %v551 = vadd.f32 %v242, %v550
      %552 = vmatmul.bf16.gmra.mxu0 %v432
      %v553 = vpop.f32.mrf.mxu0
      %v554 = vadd.f32 %v242, %v553
      %v555 = vpop.f32.mrf.mxu0
      %v556 = vadd.f32 %v242, %v555
      %557 = vmatmul.bf16.gmra.mxu0 %v435
      %v558 = vpop.f32.mrf.mxu0
      %v559 = vadd.f32 %v242, %v558
      %v560 = vpop.f32.mrf.mxu0
      %v561 = vadd.f32 %v242, %v560
      %562 = vmatmul.bf16.gmra.mxu0 %v438
      %v563 = vpop.f32.mrf.mxu0
      %v564 = vadd.f32 %v242, %v563
      %v565 = vpop.f32.mrf.mxu0
      %v566 = vadd.f32 %v242, %v565
      %567 = vmatmul.bf16.gmra.mxu0 %v441
      %v568 = vpop.f32.mrf.mxu0
      %v569 = vadd.f32 %v242, %v568
      %v570 = vpop.f32.mrf.mxu0
      %v571 = vadd.f32 %v242, %v570
      %572 = vmatmul.bf16.gmra.mxu0 %v444
      %v573 = vpop.f32.mrf.mxu0
      %v574 = vadd.f32 %v242, %v573
      %v575 = vpop.f32.mrf.mxu0
      %v576 = vadd.f32 %v242, %v575
      %577 = vmatmul.bf16.gmra.mxu0 %v447
      %v578 = vpop.f32.mrf.mxu0
      %v579 = vadd.f32 %v242, %v578
      %v580 = vpop.f32.mrf.mxu0
      %v581 = vadd.f32 %v242, %v580
      %582 = vmatmul.bf16.gmra.mxu0 %v450
      %v583 = vpop.f32.mrf.mxu0
      %v584 = vadd.f32 %v242, %v583
      %v585 = vpop.f32.mrf.mxu0
      %v586 = vadd.f32 %v242, %v585
      %587 = vmatmul.bf16.gmra.mxu0 %v453
      %v588 = vpop.f32.mrf.mxu0
      %v589 = vadd.f32 %v242, %v588
      %v590 = vpop.f32.mrf.mxu0
      %v591 = vadd.f32 %v242, %v590
      %592 = vmatmul.bf16.gmra.mxu0 %v456
      %v593 = vpop.f32.mrf.mxu0
      %v594 = vadd.f32 %v242, %v593
      %v595 = vpop.f32.mrf.mxu0
      %v596 = vadd.f32 %v242, %v595
      %597 = vmatmul.bf16.gmra.mxu0 %v459
      %v598 = vpop.f32.mrf.mxu0
      %v599 = vadd.f32 %v242, %v598
      %v600 = vpop.f32.mrf.mxu0
      %v601 = vadd.f32 %v242, %v600
      %602 = vmatmul.bf16.gmra.mxu0 %v462
      %v603 = vpop.f32.mrf.mxu0
      %v604 = vadd.f32 %v242, %v603
      %v605 = vpop.f32.mrf.mxu0
      %v606 = vadd.f32 %v242, %v605
      %607 = vmatmul.bf16.gmra.mxu0 %v465
      %v608 = vpop.f32.mrf.mxu0
      %v609 = vadd.f32 %v242, %v608
      %v610 = vpop.f32.mrf.mxu0
      %v611 = vadd.f32 %v242, %v610
      %612 = vmatmul.bf16.gmra.mxu0 %v468
      %v613 = vpop.f32.mrf.mxu0
      %v614 = vadd.f32 %v242, %v613
      %v615 = vpop.f32.mrf.mxu0
      %v616 = vadd.f32 %v242, %v615
      %617 = vmatmul.bf16.gmra.mxu0 %v471
      %v618 = vpop.f32.mrf.mxu0
      %v619 = vadd.f32 %v242, %v618
      %v620 = vpop.f32.mrf.mxu0
      %v621 = vadd.f32 %v242, %v620
      %622 = vmatmul.bf16.gmra.mxu0 %v474
      %v623 = vpop.f32.mrf.mxu0
      %v624 = vadd.f32 %v242, %v623
      %v625 = vpop.f32.mrf.mxu0
      %v626 = vadd.f32 %v242, %v625
      %627 = vmatmul.bf16.gmra.mxu0 %v477
      %v628 = vpop.f32.mrf.mxu0
      %v629 = vadd.f32 %v242, %v628
      %v630 = vpop.f32.mrf.mxu0
      %v631 = vadd.f32 %v242, %v630
      %632 = vmatmul.bf16.gmra.mxu0 %v480
      %v633 = vpop.f32.mrf.mxu0
      %v634 = vadd.f32 %v242, %v633
      %v635 = vpop.f32.mrf.mxu0
      %v636 = vadd.f32 %v242, %v635
      %637 = vmatmul.bf16.gmra.mxu0 %v483
      %v638 = vpop.f32.mrf.mxu0
      %v639 = vadd.f32 %v242, %v638
      %v640 = vpop.f32.mrf.mxu0
      %v641 = vadd.f32 %v242, %v640
      %642 = vmatmul.bf16.gmra.mxu0 %v486
      %v643 = vpop.f32.mrf.mxu0
      %v644 = vadd.f32 %v242, %v643
      %v645 = vpop.f32.mrf.mxu0
      %v646 = vadd.f32 %v242, %v645
      %647 = vmatmul.bf16.gmra.mxu0 %v489
      %v648 = vpop.f32.mrf.mxu0
      %v649 = vadd.f32 %v242, %v648
      %v650 = vpop.f32.mrf.mxu0
      %v651 = vadd.f32 %v242, %v650
      %652 = vmatmul.bf16.gmra.mxu0 %v492
      %v653 = vpop.f32.mrf.mxu0
      %v654 = vadd.f32 %v242, %v653
      %v655 = vpop.f32.mrf.mxu0
      %v656 = vadd.f32 %v242, %v655
      %657 = vmatmul.bf16.gmra.mxu0 %v495
      %v658 = vpop.f32.mrf.mxu0
      %v659 = vadd.f32 %v242, %v658
      %v660 = vpop.f32.mrf.mxu0
      %v661 = vadd.f32 %v242, %v660
      %662 = vmatmul.bf16.gmra.mxu0 %v498
      %v663 = vpop.f32.mrf.mxu0
      %v664 = vadd.f32 %v242, %v663
      %v665 = vpop.f32.mrf.mxu0
      %v666 = vadd.f32 %v242, %v665
      %667 = vmatmul.bf16.gmra.mxu0 %v501
      %v668 = vpop.f32.mrf.mxu0
      %v669 = vadd.f32 %v242, %v668
      %v670 = vpop.f32.mrf.mxu0
      %v671 = vadd.f32 %v242, %v670
      %672 = vmatmul.bf16.gmra.mxu0 %v504
      %v673 = vpop.f32.mrf.mxu0
      %v674 = vadd.f32 %v242, %v673
      %v675 = vpop.f32.mrf.mxu0
      %v676 = vadd.f32 %v242, %v675
      %677 = vmatmul.bf16.gmra.mxu0 %v507
      %v678 = vpop.f32.mrf.mxu0
      %v679 = vadd.f32 %v242, %v678
      %v680 = vpop.f32.mrf.mxu0
      %v681 = vadd.f32 %v242, %v680
      %682 = vmatmul.bf16.gmra.mxu0 %v510
      %v683 = vpop.f32.mrf.mxu0
      %v684 = vadd.f32 %v242, %v683
      %v685 = vpop.f32.mrf.mxu0
      %v686 = vadd.f32 %v242, %v685
      %687 = vdwg.mxu0
      %v688 = vmax.f32 %v529, 0.0
      %v689 = vmax.f32 %v531, 0.0
      %v690 = vmax.f32 %v534, 0.0
      %v691 = vmax.f32 %v536, 0.0
      %v692 = vmax.f32 %v539, 0.0
      %v693 = vmax.f32 %v541, 0.0
      %v694 = vmax.f32 %v544, 0.0
      %v695 = vmax.f32 %v546, 0.0
      %v696 = vmax.f32 %v549, 0.0
      %v697 = vmax.f32 %v551, 0.0
      %v698 = vmax.f32 %v554, 0.0
      %v699 = vmax.f32 %v556, 0.0
      %v700 = vmax.f32 %v559, 0.0
      %v701 = vmax.f32 %v561, 0.0
      %v702 = vmax.f32 %v564, 0.0
      %v703 = vmax.f32 %v566, 0.0
      %v704 = vmax.f32 %v569, 0.0
      %v705 = vmax.f32 %v571, 0.0
      %v706 = vmax.f32 %v574, 0.0
      %v707 = vmax.f32 %v576, 0.0
      %v708 = vmax.f32 %v579, 0.0
      %v709 = vmax.f32 %v581, 0.0
      %v710 = vmax.f32 %v584, 0.0
      %v711 = vmax.f32 %v586, 0.0
      %v712 = vmax.f32 %v589, 0.0
      %v713 = vmax.f32 %v591, 0.0
      %v714 = vmax.f32 %v594, 0.0
      %v715 = vmax.f32 %v596, 0.0
      %v716 = vmax.f32 %v599, 0.0
      %v717 = vmax.f32 %v601, 0.0
      %v718 = vmax.f32 %v604, 0.0
      %v719 = vmax.f32 %v606, 0.0
      %v720 = vmax.f32 %v609, 0.0
      %v721 = vmax.f32 %v611, 0.0
      %v722 = vmax.f32 %v614, 0.0
      %v723 = vmax.f32 %v616, 0.0
      %v724 = vmax.f32 %v619, 0.0
      %v725 = vmax.f32 %v621, 0.0
      %v726 = vmax.f32 %v624, 0.0
      %v727 = vmax.f32 %v626, 0.0
      %v728 = vmax.f32 %v629, 0.0
      %v729 = vmax.f32 %v631, 0.0
      %v730 = vmax.f32 %v634, 0.0
      %v731 = vmax.f32 %v636, 0.0
      %v732 = vmax.f32 %v639, 0.0
      %v733 = vmax.f32 %v641, 0.0
      %v734 = vmax.f32 %v644, 0.0
      %v735 = vmax.f32 %v646, 0.0
      %v736 = vmax.f32 %v649, 0.0
      %v737 = vmax.f32 %v651, 0.0
      %v738 = vmax.f32 %v654, 0.0
      %v739 = vmax.f32 %v656, 0.0
      %v740 = vmax.f32 %v659, 0.0
      %v741 = vmax.f32 %v661, 0.0
      %v742 = vmax.f32 %v664, 0.0
      %v743 = vmax.f32 %v666, 0.0
      %v744 = vmax.f32 %v669, 0.0
      %v745 = vmax.f32 %v671, 0.0
      %v746 = vmax.f32 %v674, 0.0
      %v747 = vmax.f32 %v676, 0.0
      %v748 = vmax.f32 %v679, 0.0
      %v749 = vmax.f32 %v681, 0.0
      %v750 = vmax.f32 %v684, 0.0
      %v751 = vmax.f32 %v686, 0.0
      %vm752 = vcmask 261120
      %v753 = vsel %vm752, %v688, 0.0
      %v754 = vsel %vm752, %v689, 0.0
      %v755 = vadd.f32 %v753, %v754
      %v756 = vsel %vm752, %v690, 0.0
      %v757 = vadd.f32 %v755, %v756
      %v758 = vsel %vm752, %v691, 0.0
      %v759 = vadd.f32 %v757, %v758
      %v760 = vsel %vm752, %v692, 0.0
      %v761 = vadd.f32 %v759, %v760
      %v762 = vsel %vm752, %v693, 0.0
      %v763 = vadd.f32 %v761, %v762
      %v764 = vsel %vm752, %v694, 0.0
      %v765 = vadd.f32 %v763, %v764
      %v766 = vsel %vm752, %v695, 0.0
      %v767 = vadd.f32 %v765, %v766
      %v768 = vsel %vm752, %v696, 0.0
      %v769 = vadd.f32 %v767, %v768
      %v770 = vsel %vm752, %v697, 0.0
      %v771 = vadd.f32 %v769, %v770
      %v772 = vsel %vm752, %v698, 0.0
      %v773 = vadd.f32 %v771, %v772
      %v774 = vsel %vm752, %v699, 0.0
      %v775 = vadd.f32 %v773, %v774
      %v776 = vsel %vm752, %v700, 0.0
      %v777 = vadd.f32 %v775, %v776
      %v778 = vsel %vm752, %v701, 0.0
      %v779 = vadd.f32 %v777, %v778
      %v780 = vsel %vm752, %v702, 0.0
      %v781 = vadd.f32 %v779, %v780
      %v782 = vsel %vm752, %v703, 0.0
      %v783 = vadd.f32 %v781, %v782
      %v784 = vsel %vm752, %v704, 0.0
      %v785 = vadd.f32 %v783, %v784
      %v786 = vsel %vm752, %v705, 0.0
      %v787 = vadd.f32 %v785, %v786
      %v788 = vsel %vm752, %v706, 0.0
      %v789 = vadd.f32 %v787, %v788
      %v790 = vsel %vm752, %v707, 0.0
      %v791 = vadd.f32 %v789, %v790
      %v792 = vsel %vm752, %v708, 0.0
      %v793 = vadd.f32 %v791, %v792
      %v794 = vsel %vm752, %v709, 0.0
      %v795 = vadd.f32 %v793, %v794
      %v796 = vsel %vm752, %v710, 0.0
      %v797 = vadd.f32 %v795, %v796
      %v798 = vsel %vm752, %v711, 0.0
      %v799 = vadd.f32 %v797, %v798
      %v800 = vsel %vm752, %v712, 0.0
      %v801 = vadd.f32 %v799, %v800
      %v802 = vsel %vm752, %v713, 0.0
      %v803 = vadd.f32 %v801, %v802
      %v804 = vsel %vm752, %v714, 0.0
      %v805 = vadd.f32 %v803, %v804
      %v806 = vsel %vm752, %v715, 0.0
      %v807 = vadd.f32 %v805, %v806
      %v808 = vsel %vm752, %v716, 0.0
      %v809 = vadd.f32 %v807, %v808
      %v810 = vsel %vm752, %v717, 0.0
      %v811 = vadd.f32 %v809, %v810
      %v812 = vsel %vm752, %v718, 0.0
      %v813 = vadd.f32 %v811, %v812
      %v814 = vsel %vm752, %v719, 0.0
      %v815 = vadd.f32 %v813, %v814
      %v816 = vrot.slane %v815, 4
      %v817 = vadd.f32 %v815, %v816
      %v818 = vrot.slane %v817, 2
      %v819 = vadd.f32 %v817, %v818
      %v820 = vrot.slane %v819, 1
      %v821 = vadd.f32 %v819, %v820
      %v822 = vmul.f32 %v821, 0.00390625
      %v823 = vsel %vm752, %v720, 0.0
      %v824 = vsel %vm752, %v721, 0.0
      %v825 = vadd.f32 %v823, %v824
      %v826 = vsel %vm752, %v722, 0.0
      %v827 = vadd.f32 %v825, %v826
      %v828 = vsel %vm752, %v723, 0.0
      %v829 = vadd.f32 %v827, %v828
      %v830 = vsel %vm752, %v724, 0.0
      %v831 = vadd.f32 %v829, %v830
      %v832 = vsel %vm752, %v725, 0.0
      %v833 = vadd.f32 %v831, %v832
      %v834 = vsel %vm752, %v726, 0.0
      %v835 = vadd.f32 %v833, %v834
      %v836 = vsel %vm752, %v727, 0.0
      %v837 = vadd.f32 %v835, %v836
      %v838 = vsel %vm752, %v728, 0.0
      %v839 = vadd.f32 %v837, %v838
      %v840 = vsel %vm752, %v729, 0.0
      %v841 = vadd.f32 %v839, %v840
      %v842 = vsel %vm752, %v730, 0.0
      %v843 = vadd.f32 %v841, %v842
      %v844 = vsel %vm752, %v731, 0.0
      %v845 = vadd.f32 %v843, %v844
      %v846 = vsel %vm752, %v732, 0.0
      %v847 = vadd.f32 %v845, %v846
      %v848 = vsel %vm752, %v733, 0.0
      %v849 = vadd.f32 %v847, %v848
      %v850 = vsel %vm752, %v734, 0.0
      %v851 = vadd.f32 %v849, %v850
      %v852 = vsel %vm752, %v735, 0.0
      %v853 = vadd.f32 %v851, %v852
      %v854 = vsel %vm752, %v736, 0.0
      %v855 = vadd.f32 %v853, %v854
      %v856 = vsel %vm752, %v737, 0.0
      %v857 = vadd.f32 %v855, %v856
      %v858 = vsel %vm752, %v738, 0.0
      %v859 = vadd.f32 %v857, %v858
      %v860 = vsel %vm752, %v739, 0.0
      %v861 = vadd.f32 %v859, %v860
      %v862 = vsel %vm752, %v740, 0.0
      %v863 = vadd.f32 %v861, %v862
      %v864 = vsel %vm752, %v741, 0.0
      %v865 = vadd.f32 %v863, %v864
      %v866 = vsel %vm752, %v742, 0.0
      %v867 = vadd.f32 %v865, %v866
      %v868 = vsel %vm752, %v743, 0.0
      %v869 = vadd.f32 %v867, %v868
      %v870 = vsel %vm752, %v744, 0.0
      %v871 = vadd.f32 %v869, %v870
      %v872 = vsel %vm752, %v745, 0.0
      %v873 = vadd.f32 %v871, %v872
      %v874 = vsel %vm752, %v746, 0.0
      %v875 = vadd.f32 %v873, %v874
      %v876 = vsel %vm752, %v747, 0.0
      %v877 = vadd.f32 %v875, %v876
      %v878 = vsel %vm752, %v748, 0.0
      %v879 = vadd.f32 %v877, %v878
      %v880 = vsel %vm752, %v749, 0.0
      %v881 = vadd.f32 %v879, %v880
      %v882 = vsel %vm752, %v750, 0.0
      %v883 = vadd.f32 %v881, %v882
      %v884 = vsel %vm752, %v751, 0.0
      %v885 = vadd.f32 %v883, %v884
      %v886 = vrot.slane %v885, 4
      %v887 = vadd.f32 %v885, %v886
      %v888 = vrot.slane %v887, 2
      %v889 = vadd.f32 %v887, %v888
      %v890 = vrot.slane %v889, 1
      %v891 = vadd.f32 %v889, %v890
      %v892 = vmul.f32 %v891, 0.00390625
      %vm893 = vcmask 1040384
      %v894 = vsel %vm893, %v822, %v892
      %vm895 = vcmask 254976
      %896 = vst.msk [vmem:[%s170] sm:$0x3] %vm895, %v894
      %p897 = scmp.lt.s32.totalorder %s14, 1
      %s898 = scalar_select %p897, %s14, 1
      %s899 = smul.addr %s898, 2
      %s900 = scalar_lea.vmem %s3, %s899
      // Predicated region
      $region33: #{_lambda_.2} parent=31 // pred_check
        %p901 = pneg %p100
      $region34: #{_lambda_.2} parent=31 // pred_check_branch
        %903 = sbr.rel (%p901) target = $region36
      $region35: #{_lambda_.2} parent=31 // pred_region
        _
      $region36: #{_lambda_.2} parent=31 // pred_fallthru
        _
    $region32: #{_lambda_.2} parent=5 // pred_fallthru
      _
    %p904 = scmp.le.s32.totalorder 2, %s9
    // Predicated region
    $region37: #{_lambda_.2} parent=5 // pred_check
      %p905 = pneg %p904
    $region38: #{_lambda_.2} parent=5 // pred_check_branch
      %907 = sbr.rel (%p905) target = $region40
    $region39: #{_lambda_.2} parent=5 // pred_region
      %s908 = ssub.s32 %s9, 2
      // Predicated region
      $region41: #{_lambda_.2} parent=39 // pred_check
        %p909 = pneg %p106
      $region42: #{_lambda_.2} parent=39 // pred_check_branch
        %911 = sbr.rel (%p909) target = $region44
      $region43: #{_lambda_.2} parent=39 // pred_region
        %p912 = scmp.lt.s32.totalorder %s15, 1
        %s913 = scalar_select %p912, %s15, 1
        %s914 = smul.addr %s913, 2
        %s915 = scalar_lea.vmem %s3, %s914
      $region44: #{_lambda_.2} parent=39 // pred_fallthru
        _
    $region40: #{_lambda_.2} parent=5 // pred_fallthru
      _
  $region6: #{_lambda_.2} parent=0 // loop_footer
    %s13 = sadd.s32 1, %s9
  $region7: #{_lambda_.2} parent=0 // loop_footer_branch
    %8 = sbr.rel target = $region3
  $region8: #{_lambda_.2} parent=0 // loop_exit
    _

// kernel: _lambda_.3
$region0: #{_lambda_.3}
  #allocation0 [shape = 'u32[]', space=smem, size = 0x4, offset = 0x4, fixed_abs, tag = 'smem constant byte address 0x4 - core index']
  #allocation1 [shape = 'u32[72,128]{1,0:T(1,128)}', space=vmem, size = 0x9000, scoped, tag = 'internal scratch']
  %s0 = inlined_call_operand.vmem [shape: f32[4,32], index: 0, kind: input, shape index: {}]
  %s1 = inlined_call_operand.vmem [shape: f32[1,64], index: 1, kind: input, shape index: {}]
  %s2 = inlined_call_operand.vmem [shape: f32[64,32], index: 2, kind: input, shape index: {}]
  %s3 = inlined_call_operand.vmem [shape: f32[1,32], index: 3, kind: input, shape index: {}]
  %s4 = inlined_call_operand.vmem [shape: f32[32,32], index: 4, kind: input, shape index: {}]
  %s5 = inlined_call_operand.vmem [shape: f32[1,32], index: 5, kind: input, shape index: {}]
  %s6 = inlined_call_operand.vmem [shape: f32[32,64], index: 6, kind: input, shape index: {}]
  %s7 = inlined_call_operand.vmem [shape: f32[1,64], index: 7, kind: input, shape index: {}]
  %s8 = inlined_call_operand.vmem [shape: f32[4,2], index: 8, kind: output, shape index: {}]
  %s9 = sld [smem:[#allocation0]]
  $region42: #{_lambda_.3} parent=0
    _
  %s11 = ssub.s32 1, %s9
  %s12 = scalar_select 0, %s11, %s9
  // Predicated region
  $region2: #{_lambda_.3} parent=0 // pred_check
    _
  $region3: #{_lambda_.3} parent=0 // pred_check_branch
    %14 = sbr.rel (0) target = $region5
  $region4: #{_lambda_.3} parent=0 // pred_region
    _
  $region5: #{_lambda_.3} parent=0 // pred_fallthru
    _
  // Predicated region
  $region6: #{_lambda_.3} parent=0 // pred_check
    _
  $region7: #{_lambda_.3} parent=0 // pred_check_branch
    %16 = sbr.rel (0) target = $region9
  $region8: #{_lambda_.3} parent=0 // pred_region
    _
  $region9: #{_lambda_.3} parent=0 // pred_fallthru
    _
  // Predicated region
  $region10: #{_lambda_.3} parent=0 // pred_check
    _
  $region11: #{_lambda_.3} parent=0 // pred_check_branch
    %18 = sbr.rel (0) target = $region13
  $region12: #{_lambda_.3} parent=0 // pred_region
    _
  $region13: #{_lambda_.3} parent=0 // pred_fallthru
    _
  // Predicated region
  $region14: #{_lambda_.3} parent=0 // pred_check
    _
  $region15: #{_lambda_.3} parent=0 // pred_check_branch
    %20 = sbr.rel (0) target = $region17
  $region16: #{_lambda_.3} parent=0 // pred_region
    _
  $region17: #{_lambda_.3} parent=0 // pred_fallthru
    _
  // Predicated region
  $region18: #{_lambda_.3} parent=0 // pred_check
    _
  $region19: #{_lambda_.3} parent=0 // pred_check_branch
    %22 = sbr.rel (0) target = $region21
  $region20: #{_lambda_.3} parent=0 // pred_region
    _
  $region21: #{_lambda_.3} parent=0 // pred_fallthru
    _
  // Predicated region
  $region22: #{_lambda_.3} parent=0 // pred_check
    _
  $region23: #{_lambda_.3} parent=0 // pred_check_branch
    %24 = sbr.rel (0) target = $region25
  $region24: #{_lambda_.3} parent=0 // pred_region
    _
  $region25: #{_lambda_.3} parent=0 // pred_fallthru
    _
  // Predicated region
  $region26: #{_lambda_.3} parent=0 // pred_check
    _
  $region27: #{_lambda_.3} parent=0 // pred_check_branch
    %26 = sbr.rel (0) target = $region29
  $region28: #{_lambda_.3} parent=0 // pred_region
    _
  $region29: #{_lambda_.3} parent=0 // pred_fallthru
    _
  // Predicated region
  $region30: #{_lambda_.3} parent=0 // pred_check
    _
  $region31: #{_lambda_.3} parent=0 // pred_check_branch
    %28 = sbr.rel (0) target = $region33
  $region32: #{_lambda_.3} parent=0 // pred_region
    _
  $region33: #{_lambda_.3} parent=0 // pred_fallthru
    _
  %v29 = vld [vmem:[%s0] sm:$0xf]
  %v30 = vld [vmem:[%s1] sm:$0x1]
  %v31 = vld [vmem:[%s2] sm:$0xff]
  %v32 = vld [vmem:[%s2 + $0x8] sm:$0xff]
  %v33 = vld [vmem:[%s2 + $0x10] sm:$0xff]
  %v34 = vld [vmem:[%s2 + $0x18] sm:$0xff]
  %v35 = vld [vmem:[%s2 + $0x20] sm:$0xff]
  %v36 = vld [vmem:[%s2 + $0x28] sm:$0xff]
  %v37 = vld [vmem:[%s2 + $0x30] sm:$0xff]
  %v38 = vld [vmem:[%s2 + $0x38] sm:$0xff]
  %v39 = vld [vmem:[%s3] sm:$0x1]
  %vm40 = vcmask 523264
  %v42 = vsel %vm40, %v30, 0
  %44 = vmatpush.msra.mxu0 0.0
  %45 = vmatpush.msra.mxu0 0.0
  %46 = vmatpush.msra.mxu0 0.0
  %47 = vmatpush.msra.mxu0 0.0
  %48 = vmatpush.msra.mxu0 0.0
  %49 = vmatpush.msra.mxu0 0.0
  %50 = vmatpush.msra.mxu0 0.0
  %51 = vmatpush.msra.mxu0 0.0
  %52 = vmatpush.msra.mxu0 %v38
  %53 = vmatpush.msra.mxu0 %v37
  %54 = vmatpush.msra.mxu0 %v36
  %55 = vmatpush.msra.mxu0 %v35
  %56 = vmatpush.msra.mxu0 %v34
  %57 = vmatpush.msra.mxu0 %v33
  %58 = vmatpush.msra.mxu0 %v32
  %59 = vmatpush.msra.mxu0 %v31
  %60 = vmatmul.f32.gmra.mxu0 %v42
  %v61 = vpop.f32.mrf.mxu0
  %v62 = vadd.f32 %v39, %v61
  %63 = vdwg.mxu0
  %v64 = vmax.f32 %v62, 0.0
  %v65 = vld [vmem:[%s4] sm:$0xff]
  %v66 = vld [vmem:[%s4 + $0x8] sm:$0xff]
  %v67 = vld [vmem:[%s4 + $0x10] sm:$0xff]
  %v68 = vld [vmem:[%s4 + $0x18] sm:$0xff]
  %v69 = vld [vmem:[%s5] sm:$0x1]
  %vm70 = vcmask 261120
  %v72 = vsel %vm70, %v64, 0
  %74 = vmatpush.msra.mxu0 0.0
  %75 = vmatpush.msra.mxu0 0.0
  %76 = vmatpush.msra.mxu0 0.0
  %77 = vmatpush.msra.mxu0 0.0
  %78 = vmatpush.msra.mxu0 0.0
  %79 = vmatpush.msra.mxu0 0.0
  %80 = vmatpush.msra.mxu0 0.0
  %81 = vmatpush.msra.mxu0 0.0
  %82 = vmatpush.msra.mxu0 0.0
  %83 = vmatpush.msra.mxu0 0.0
  %84 = vmatpush.msra.mxu0 0.0
  %85 = vmatpush.msra.mxu0 0.0
  %86 = vmatpush.msra.mxu0 %v68
  %87 = vmatpush.msra.mxu0 %v67
  %88 = vmatpush.msra.mxu0 %v66
  %89 = vmatpush.msra.mxu0 %v65
  %90 = vmatmul.f32.gmra.mxu0 %v72
  %v91 = vpop.f32.mrf.mxu0
  %v92 = vadd.f32 %v69, %v91
  %93 = vdwg.mxu0
  %v94 = vmax.f32 %v92, 0.0
  %v95 = vld [vmem:[%s6] sm:$0xff]
  %v96 = vld [vmem:[%s6 + $0x8] sm:$0xff]
  %v97 = vld [vmem:[%s6 + $0x10] sm:$0xff]
  %v98 = vld [vmem:[%s6 + $0x18] sm:$0xff]
  %v99 = vld [vmem:[%s7] sm:$0x1]
  %v101 = vsel %vm70, %v94, 0
  %103 = vmatpush.msra.mxu0 0.0
  %104 = vmatpush.msra.mxu0 0.0
  %105 = vmatpush.msra.mxu0 0.0
  %106 = vmatpush.msra.mxu0 0.0
  %107 = vmatpush.msra.mxu0 0.0
  %108 = vmatpush.msra.mxu0 0.0
  %109 = vmatpush.msra.mxu0 0.0
  %110 = vmatpush.msra.mxu0 0.0
  %111 = vmatpush.msra.mxu0 0.0
  %112 = vmatpush.msra.mxu0 0.0
  %113 = vmatpush.msra.mxu0 0.0
  %114 = vmatpush.msra.mxu0 0.0
  %115 = vmatpush.msra.mxu0 %v98
  %116 = vmatpush.msra.mxu0 %v97
  %117 = vmatpush.msra.mxu0 %v96
  %118 = vmatpush.msra.mxu0 %v95
  %119 = vmatmul.f32.gmra.mxu0 %v101
  %v120 = vpop.f32.mrf.mxu0
  %v121 = vadd.f32 %v99, %v120
  %122 = vdwg.mxu0
  %v124 = vrot.slane %v121, 7
  %125 = vrot.lane.b32.xlu0 %v124, 96
  %v126 = vpop.permute.xlu0 %125
  %vm128 = vcmask 1040384
  %v129 = vsel %vm128, %v121, %v126
  %v131 = vsel %vm70, %v29, 0
  %v134 = vsel %vm70, %v129, 0
  %136 = vmatpush.xpose.msra.mxu0 0.0
  %137 = vmatpush.xpose.msra.mxu0 0.0
  %138 = vmatpush.xpose.msra.mxu0 0.0
  %139 = vmatpush.xpose.msra.mxu0 0.0
  %140 = vmatpush.xpose.msra.mxu0 0.0
  %141 = vmatpush.xpose.msra.mxu0 0.0
  %142 = vmatpush.xpose.msra.mxu0 0.0
  %143 = vmatpush.xpose.msra.mxu0 0.0
  %144 = vmatpush.xpose.msra.mxu0 0.0
  %145 = vmatpush.xpose.msra.mxu0 0.0
  %146 = vmatpush.xpose.msra.mxu0 0.0
  %147 = vmatpush.xpose.msra.mxu0 0.0
  %148 = vmatpush.xpose.msra.mxu0 0.0
  %149 = vmatpush.xpose.msra.mxu0 0.0
  %150 = vmatpush.xpose.msra.mxu0 0.0
  %151 = vmatpush.xpose.msra.mxu0 %v134
  %152 = vmatmul.f32.gmra.mxu0 %v131
  %v153 = vpop.f32.mrf.mxu0
  %v154 = vadd.f32 0.0, %v153
  %155 = vdwg.mxu0
  %vm156 = vcmask 11264
  %157 = vst.msk [vmem:[%s8] sm:$0xf] %vm156, %v154
  // Predicated region
  $region34: #{_lambda_.3} parent=0 // pred_check
    _
  $region35: #{_lambda_.3} parent=0 // pred_check_branch
    %159 = sbr.rel (0) target = $region37
  $region36: #{_lambda_.3} parent=0 // pred_region
    _
  $region37: #{_lambda_.3} parent=0 // pred_fallthru
    _
  // Predicated region
  $region38: #{_lambda_.3} parent=0 // pred_check
    _
  $region39: #{_lambda_.3} parent=0 // pred_check_branch
    %161 = sbr.rel (0) target = $region41
  $region40: #{_lambda_.3} parent=0 // pred_region
    _
  $region41: #{_lambda_.3} parent=0 // pred_fallthru
    _

</llo_original>
